<compile_context>
chip_gen: v6e
topology: v6e:2x2x1
jax: 0.10.0
libtpu: 0.0.40
codegen_flags: <defaults>
</compile_context>

<pallas_src>
import jax
import jax.numpy as jnp
from jax.experimental import pallas as pl
from jax.experimental.pallas import tpu as pltpu


# output sub-pixel q = di*2 + dj  ->  original branch index (c1, c2, c3, c4 = 0..3)
_Q2ORIG = (0, 2, 3, 1)


def _ilc_kernel(z_ref, w_ref, c_ref, o_ref):
    """One (batch, row-tile, col-tile) grid step.

    z_ref: (1, TH, TW*Cin)          input rows, lane order (j, ci)
    w_ref: (TW*Cin, 4*TW*Cout)      fused block-diagonal weight, cols (di, j, dj, c)
    c_ref: (1, 4, 4*TW*Cout)        rows = [bias, background, top-row corr, bottom-row corr]
    o_ref: (1, TH, 2, 2*TW*Cout)    output, dims (row, di, (j, dj, c))
    """
    TH = o_ref.shape[1]
    half = o_ref.shape[3]
    t = pl.program_id(1)

    # One lane-dense MXU matmul covers all four branches; bias + ReLU + interior
    # background are per-lane adds.
    y = jnp.dot(z_ref[0], w_ref[...], preferred_element_type=jnp.float32)
    y = jnp.maximum(y + c_ref[0, 0:1, :], 0.0) + c_ref[0, 1:2, :]

    o_ref[0, :, 0, :] = y[:, :half].astype(o_ref.dtype)      # di = 0 output rows
    o_ref[0, :, 1, :] = y[:, half:].astype(o_ref.dtype)      # di = 1 output rows

    # Border corrections touch exactly one output row each (image top / bottom);
    # interior row tiles skip them entirely.
    @pl.when(t == 0)
    def _():
        o_ref[0, 0:1, 0, :] = (o_ref[0, 0:1, 0, :]
                               + c_ref[0, 2:3, :half].astype(o_ref.dtype))

    @pl.when(t == pl.num_programs(1) - 1)
    def _():
        o_ref[0, TH - 1:TH, 1, :] = (o_ref[0, TH - 1:TH, 1, :]
                                     + c_ref[0, 3:4, half:].astype(o_ref.dtype))


def _build_tables(w_stack, b_stack, W, TW, w_dtype):
    """Host-side fused weight + per-lane bias/background tables.

    Per column tile the kernel's lane order is (di, j_local, dj, c):
        lane = ((di*TW + j_local)*2 + dj)*Cout + c
    """
    Cin, Cout = w_stack.shape[1], w_stack.shape[2]
    perm = jnp.array(_Q2ORIG)

    # --- fused block-diagonal weight, shared by every column tile -------------
    wq = w_stack[perm].reshape(2, 2, Cin, Cout)                          # (di, dj, Cin, Cout)
    w_px = jnp.transpose(wq, (0, 2, 1, 3)).reshape(2, Cin, 2 * Cout)     # (di, Cin, (dj, c))
    eye = jnp.eye(TW, dtype=jnp.float32)
    blk = eye[None, :, None, :, None] * w_px[:, None, :, None, :]        # (2, TW, Cin, TW, 2*Cout)
    blk = blk.reshape(2, TW * Cin, TW * 2 * Cout)
    w_big = jnp.concatenate([blk[0], blk[1]], axis=1).astype(w_dtype)    # (TW*Cin, 4*TW*Cout)

    # --- relu(bias) background bookkeeping (exact ConvTranspose2d + ZeroPad2d
    #     coverage semantics, see derivation in reference()) -------------------
    B = jnp.maximum(b_stack.astype(jnp.float32), 0.0)                    # relu(b_k), (4, Cout)
    sumB = B.sum(axis=0)
    Bq = B[perm].reshape(2, 2, Cout)                                     # relu(b) of hit branch
    bq = b_stack.astype(jnp.float32)[perm].reshape(2, 2, Cout)           # raw bias of hit branch
    R = jnp.stack([B[1] + B[3], B[0] + B[2]])    # branches excluded on top / bottom row, by di
    C = jnp.stack([B[1] + B[2], B[0] + B[3]])    # branches excluded on left / right col, by dj
    X = jnp.stack([jnp.stack([B[1], B[3]]),      # row ∩ col exclusion intersection, [di][dj]
                   jnp.stack([B[2], B[0]])])

    j = jnp.arange(W)[:, None]
    dj = jnp.arange(2)[None, :]
    col_b = jnp.where(dj == 0, j == 0, j == W - 1).astype(jnp.float32)   # (W, 2)
    cb = col_b[None, :, :, None]                                         # (1, W, 2, 1)

    bias = jnp.broadcast_to(bq[:, None, :, :], (2, W, 2, Cout))
    base = (sumB[None, None, None, :] - Bq[:, None, :, :]
            - cb * C[None, None, :, :])                                  # (2, W, 2, Cout)
    topv = -(R[0][None, None, None, :] - cb * X[0][None, None, :, :])    # only di == 0 rows used
    botv = -(R[1][None, None, None, :] - cb * X[1][None, None, :, :])    # only di == 1 rows used
    zeros = jnp.zeros((1, W, 2, Cout), jnp.float32)
    top = jnp.concatenate([topv, zeros], axis=0)
    bot = jnp.concatenate([zeros, botv], axis=0)

    rows = jnp.stack([bias, base, top, bot]).astype(jnp.float32)         # (4, 2, W, 2, Cout)
    # HBM layout: (W//TW, 4, 4*TW*Cout) so each column tile gets its own slice.
    rows = rows.reshape(4, 2, W // TW, TW, 2, Cout)
    consts = jnp.transpose(rows, (2, 0, 1, 3, 4, 5)).reshape(W // TW, 4, 4 * TW * Cout)
    return w_big, consts


def _choose_tw(W, Cin, Cout, *, k_target=256, w_bytes_cap=4 << 20):
    """Column-tile width: shared weight stays small, K targets the MXU depth,
    and z / out lane tiles stay 128-aligned unless the tile spans all of W."""
    cands = []
    for tw in range(1, W + 1):
        if W % tw:
            continue
        if tw != W and ((tw * Cin) % 128 or (2 * tw * Cout) % 128):
            continue
        cands.append(tw)
    def wbytes(tw):
        return (tw * Cin) * (4 * tw * Cout) * 4
    fitting = [tw for tw in cands if wbytes(tw) <= w_bytes_cap]
    if not fitting:
        return cands[0]                       # smallest legal tile (minimizes weight VMEM)
    capped = [tw for tw in fitting if tw * Cin <= k_target] or fitting[:1]
    return max(capped)


def _choose_th(H, n_batch, n_wtiles, in_row_bytes, out_row_bytes,
               *, tile_budget_bytes=8 << 20, min_parallel_steps=4):
    """Row-tile height: largest divisor of H (multiple of 8, or H itself) whose
    double-buffered working set fits the budget, preferring enough grid steps
    to keep multi-core parts busy.  Always returns a legal, defined tile."""
    cands = sorted({d for d in range(8, H + 1, 8) if H % d == 0} | {H}, reverse=True)

    def working_set(th):                       # double-buffered z + out blocks
        return 2 * th * (in_row_bytes + out_row_bytes)

    fitting = [th for th in cands if working_set(th) <= tile_budget_bytes]
    if not fitting:
        return min(cands)                      # smallest working set available
    for th in fitting:                         # largest tile with enough parallel steps
        if n_batch * (H // th) * n_wtiles >= min_parallel_steps:
            return th
    return fitting[-1]                         # maximize steps if the target is unreachable


def ilc_upsampler(z, w_stack, b_stack, *, channels_last=False,
                  input_channels_last=False, compute_dtype=None,
                  tile_budget_bytes=8 << 20):
    """z: (N, Cin, H, W) (or (N, H, W, Cin) with input_channels_last=True);
    w_stack: (4, Cin, Cout); b_stack: (4, Cout).

    Returns (N, Cout, 2H, 2W) (module semantics) or (N, 2H, 2W, Cout) with
    channels_last=True — the latter needs no post-kernel pass over the output."""
    if input_channels_last:
        N, H, W, Cin = z.shape
        z2 = z.reshape(N, H, W * Cin)
    else:
        N, Cin, H, W = z.shape
        # TODO(synk): keep activations NHWC upstream (input_channels_last=True) to
        # drop this extra (small) pass over z as well.
        z2 = jnp.transpose(z, (0, 2, 3, 1)).reshape(N, H, W * Cin)
    Cout = w_stack.shape[-1]
    if compute_dtype is not None:               # e.g. jnp.bfloat16 on v6e/v7x
        z2 = z2.astype(compute_dtype)

    TW = _choose_tw(W, Cin, Cout)
    K, LT, half = TW * Cin, 4 * TW * Cout, 2 * TW * Cout
    n_wtiles = W // TW

    w_big, consts = _build_tables(w_stack, b_stack, W, TW, z2.dtype)

    itm = z2.dtype.itemsize
    in_row_bytes = K * itm
    out_row_bytes = 8 * half * 4                # conservative: (2, half) slab padded to 8 sublanes
    TH = _choose_th(H, N, n_wtiles, in_row_bytes, out_row_bytes,
                    tile_budget_bytes=tile_budget_bytes)

    wc_bytes = w_big.size * w_big.dtype.itemsize + 4 * LT * 4
    working_set = 2 * TH * (in_row_bytes + out_row_bytes) + 2 * wc_bytes
    vmem_limit = int(min(48 << 20, max(32 << 20, 2 * working_set)))

    # True useful FLOPs (not block-diagonal-inflated); kernel-only bytes.
    flops = 2 * N * H * W * Cin * 4 * Cout
    bytes_accessed = int(z2.size * itm + N * H * 4 * W * Cout * 4
                         + w_big.size * w_big.dtype.itemsize + consts.size * 4)

    out = pl.pallas_call(
        _ilc_kernel,
        out_shape=jax.ShapeDtypeStruct((N, H, 2, 2 * W * Cout), jnp.float32),
        grid_spec=pltpu.PrefetchScalarGridSpec(
            num_scalar_prefetch=0,
            grid=(N, H // TH, n_wtiles),
            in_specs=[
                pl.BlockSpec((1, TH, K), lambda n, t, w: (n, t, w)),
                # constant block index -> kept resident, DMA'd once
                pl.BlockSpec((K, LT), lambda n, t, w: (0, 0)),
                pl.BlockSpec((1, 4, LT), lambda n, t, w: (w, 0, 0)),
            ],
            out_specs=pl.BlockSpec((1, TH, 2, half), lambda n, t, w: (n, t, 0, w)),
        ),
        compiler_params=pltpu.CompilerParams(
            dimension_semantics=("parallel", "parallel", "parallel"),
            vmem_limit_bytes=vmem_limit),
        cost_estimate=pl.CostEstimate(flops=flops, transcendentals=0,
                                      bytes_accessed=bytes_accessed),
    )(z2, w_big, consts)

    # Row-major merge/split only: (N, H, 2, 2*W*Cout) -> NHWC, no data movement.
    out = out.reshape(N, 2 * H, 2 * W, Cout)
    if channels_last:
        return out
    # The only remaining full pass over the output (module's NCHW contract).
    return jnp.transpose(out, (0, 3, 1, 2))


def reference(z, w_stack, b_stack):
    """Pure-JAX emulation of the PyTorch module (ConvTranspose2d 1x1 stride 2 +
    ReLU + ZeroPad2d, summed over the four branches)."""
    N, Cin, H, W = z.shape
    Cout = w_stack.shape[-1]
    pads = ((0, 1, 0, 1), (1, 0, 1, 0), (1, 0, 0, 1), (0, 1, 1, 0))  # (l, r, t, b)
    total = jnp.zeros((N, Cout, 2 * H, 2 * W), jnp.float32)
    for k, (l, r, t, b) in enumerate(pads):
        y = jnp.einsum("nchw,co->nohw", z, w_stack[k])
        up = jnp.zeros((N, Cout, 2 * H - 1, 2 * W - 1), jnp.float32)
        up = up.at[:, :, ::2, ::2].set(y)
        up = up + b_stack[k][None, :, None, None]      # bias on every output pixel
        up = jax.nn.relu(up)
        up = jnp.pad(up, ((0, 0), (0, 0), (t, b), (l, r)))
        total = total + up
    return total


if __name__ == "__main__":
    key = jax.random.PRNGKey(0)
    kz, kw, kb = jax.random.split(key, 3)
    N, Cin, Cout, H, W = 2, 4, 8, 16, 16                      # stride = 2
    z = jax.random.normal(kz, (N, Cin, H, W), jnp.float32)
    w_stack = 0.25 * jax.random.normal(kw, (4, Cin, Cout), jnp.float32)
    b_stack = 0.25 * jax.random.normal(kb, (4, Cout), jnp.float32)

    ref = reference(z, w_stack, b_stack)

    # Default path: exact module semantics (NCHW).
    out = jax.block_until_ready(ilc_upsampler(z, w_stack, b_stack))
    assert out.shape == (N, Cout, 2 * H, 2 * W), out.shape
    assert jnp.allclose(out, ref, atol=1e-5, rtol=1e-5), float(
        jnp.max(jnp.abs(out - ref)))

    # Channels-last fast path: no post-kernel pass over the output at all.
    out_nhwc = jax.block_until_ready(
        ilc_upsampler(z, w_stack, b_stack, channels_last=True))
    assert out_nhwc.shape == (N, 2 * H, 2 * W, Cout), out_nhwc.shape
    assert jnp.allclose(out_nhwc, jnp.transpose(ref, (0, 2, 3, 1)),
                        atol=1e-5, rtol=1e-5), float(
        jnp.max(jnp.abs(out_nhwc - jnp.transpose(ref, (0, 2, 3, 1)))))

    print("KERNEL_OK")
</pallas_src>

<mosaic_0001>
module attributes {stable_mosaic.version = 11 : i64} {
  func.func @_ilc_kernel(%arg0: i32, %arg1: i32, %arg2: i32, %arg3: memref<1x8x64xf32, #tpu.memory_space<vmem>>, %arg4: memref<64x512xf32, #tpu.memory_space<vmem>>, %arg5: memref<1x4x512xf32, #tpu.memory_space<vmem>>, %arg6: memref<1x8x2x256xf32, #tpu.memory_space<vmem>>) attributes {dimension_semantics = [#tpu.dimension_semantics<parallel>, #tpu.dimension_semantics<parallel>, #tpu.dimension_semantics<parallel>], iteration_bounds = array<i64: 2, 2, 1>, scalar_prefetch = 0 : i64, scratch_operands = 0 : i64, tpu.core_type = #tpu.core_type<tc>, window_params = [{transform_indices = @transform_0, window_bounds = array<i64: 1, 8, 64>}, {pipeline_mode = #tpu.pipeline_mode<synchronous>, transform_indices = @transform_1, window_bounds = array<i64: 64, 512>}, {transform_indices = @transform_2, window_bounds = array<i64: 1, 4, 512>}, {transform_indices = @transform_3, window_bounds = array<i64: 1, 8, 2, 256>}]} {
    %c0 = arith.constant 0 : index
    %c0_0 = arith.constant 0 : index
    %c0_1 = arith.constant 0 : index
    %0 = vector.load %arg3[%c0, %c0_0, %c0_1] : memref<1x8x64xf32, #tpu.memory_space<vmem>>, vector<1x8x64xf32>
    %1 = vector.shape_cast %0 : vector<1x8x64xf32> to vector<8x64xf32>
    %c0_2 = arith.constant 0 : index
    %c0_3 = arith.constant 0 : index
    %2 = vector.load %arg4[%c0_2, %c0_3] : memref<64x512xf32, #tpu.memory_space<vmem>>, vector<64x512xf32>
    %cst = arith.constant dense<0.000000e+00> : vector<8x512xf32>
    %3 = tpu.matmul %1, %2, %cst {dimension_numbers = #tpu.dot_dimension_numbers<[1], [0], [0], [1], [0, 0, 1, 1], [], []>} : vector<8x64xf32>, vector<64x512xf32>, vector<8x512xf32> -> vector<8x512xf32>
    %c0_4 = arith.constant 0 : index
    %c0_5 = arith.constant 0 : index
    %c0_6 = arith.constant 0 : index
    %4 = vector.load %arg5[%c0_4, %c0_5, %c0_6] : memref<1x4x512xf32, #tpu.memory_space<vmem>>, vector<1x1x512xf32>
    %5 = vector.shape_cast %4 : vector<1x1x512xf32> to vector<1x512xf32>
    %6 = vector.broadcast %5 : vector<1x512xf32> to vector<8x512xf32>
    %7 = arith.addf %3, %6 : vector<8x512xf32>
    %cst_7 = arith.constant 0.000000e+00 : f32
    %8 = vector.broadcast %cst_7 : f32 to vector<8x512xf32>
    %9 = arith.maximumf %7, %8 : vector<8x512xf32>
    %c0_8 = arith.constant 0 : index
    %c1 = arith.constant 1 : index
    %c0_9 = arith.constant 0 : index
    %10 = vector.load %arg5[%c0_8, %c1, %c0_9] : memref<1x4x512xf32, #tpu.memory_space<vmem>>, vector<1x1x512xf32>
    %11 = vector.shape_cast %10 : vector<1x1x512xf32> to vector<1x512xf32>
    %12 = vector.broadcast %11 : vector<1x512xf32> to vector<8x512xf32>
    %13 = arith.addf %9, %12 : vector<8x512xf32>
    %14 = vector.extract_strided_slice %13 {offsets = [0, 0], sizes = [8, 256], strides = [1, 1]} : vector<8x512xf32> to vector<8x256xf32>
    %c0_10 = arith.constant 0 : index
    %c0_11 = arith.constant 0 : index
    %c0_12 = arith.constant 0 : index
    %c0_13 = arith.constant 0 : index
    %15 = vector.load %arg6[%c0_10, %c0_11, %c0_12, %c0_13] : memref<1x8x2x256xf32, #tpu.memory_space<vmem>>, vector<1x8x1x256xf32>
    %16 = vector.shape_cast %15 : vector<1x8x1x256xf32> to vector<8x256xf32>
    %17 = vector.shape_cast %14 : vector<8x256xf32> to vector<1x8x1x256xf32>
    tpu.vector_store %arg6[%c0_10, %c0_11, %c0_12, %c0_13], %17 {strides = array<i32>} : memref<1x8x2x256xf32, #tpu.memory_space<vmem>>, vector<1x8x1x256xf32>,
    %18 = vector.extract_strided_slice %13 {offsets = [0, 256], sizes = [8, 256], strides = [1, 1]} : vector<8x512xf32> to vector<8x256xf32>
    %c0_14 = arith.constant 0 : index
    %c0_15 = arith.constant 0 : index
    %c1_16 = arith.constant 1 : index
    %c0_17 = arith.constant 0 : index
    %19 = vector.load %arg6[%c0_14, %c0_15, %c1_16, %c0_17] : memref<1x8x2x256xf32, #tpu.memory_space<vmem>>, vector<1x8x1x256xf32>
    %20 = vector.shape_cast %19 : vector<1x8x1x256xf32> to vector<8x256xf32>
    %21 = vector.shape_cast %18 : vector<8x256xf32> to vector<1x8x1x256xf32>
    tpu.vector_store %arg6[%c0_14, %c0_15, %c1_16, %c0_17], %21 {strides = array<i32>} : memref<1x8x2x256xf32, #tpu.memory_space<vmem>>, vector<1x8x1x256xf32>,
    %c0_i32 = arith.constant 0 : i32
    %22 = arith.cmpi eq, %arg1, %c0_i32 : i32
    %23 = arith.extui %22 : i1 to i32
    %c0_i32_18 = arith.constant 0 : i32
    %24 = arith.cmpi ne, %23, %c0_i32_18 : i32
    scf.if %24 {
      %c0_20 = arith.constant 0 : index
      %c0_21 = arith.constant 0 : index
      %c0_22 = arith.constant 0 : index
      %c0_23 = arith.constant 0 : index
      %28 = vector.load %arg6[%c0_20, %c0_21, %c0_22, %c0_23] : memref<1x8x2x256xf32, #tpu.memory_space<vmem>>, vector<1x1x1x256xf32>
      %29 = vector.shape_cast %28 : vector<1x1x1x256xf32> to vector<1x256xf32>
      %c0_24 = arith.constant 0 : index
      %c2 = arith.constant 2 : index
      %c0_25 = arith.constant 0 : index
      %30 = vector.load %arg5[%c0_24, %c2, %c0_25] : memref<1x4x512xf32, #tpu.memory_space<vmem>>, vector<1x1x256xf32>
      %31 = vector.shape_cast %30 : vector<1x1x256xf32> to vector<1x256xf32>
      %32 = arith.addf %29, %31 : vector<1x256xf32>
      %c0_26 = arith.constant 0 : index
      %c0_27 = arith.constant 0 : index
      %c0_28 = arith.constant 0 : index
      %c0_29 = arith.constant 0 : index
      %33 = vector.load %arg6[%c0_26, %c0_27, %c0_28, %c0_29] : memref<1x8x2x256xf32, #tpu.memory_space<vmem>>, vector<1x1x1x256xf32>
      %34 = vector.shape_cast %33 : vector<1x1x1x256xf32> to vector<1x256xf32>
      %35 = vector.shape_cast %32 : vector<1x256xf32> to vector<1x1x1x256xf32>
      tpu.vector_store %arg6[%c0_26, %c0_27, %c0_28, %c0_29], %35 {strides = array<i32>} : memref<1x8x2x256xf32, #tpu.memory_space<vmem>>, vector<1x1x1x256xf32>,
    } else {
    }
    %c1_i32 = arith.constant 1 : i32
    %25 = arith.cmpi eq, %arg1, %c1_i32 : i32
    %26 = arith.extui %25 : i1 to i32
    %c0_i32_19 = arith.constant 0 : i32
    %27 = arith.cmpi ne, %26, %c0_i32_19 : i32
    scf.if %27 {
      %c0_20 = arith.constant 0 : index
      %c7 = arith.constant 7 : index
      %c1_21 = arith.constant 1 : index
      %c0_22 = arith.constant 0 : index
      %28 = vector.load %arg6[%c0_20, %c7, %c1_21, %c0_22] : memref<1x8x2x256xf32, #tpu.memory_space<vmem>>, vector<1x1x1x256xf32>
      %29 = vector.shape_cast %28 : vector<1x1x1x256xf32> to vector<1x256xf32>
      %c0_23 = arith.constant 0 : index
      %c3 = arith.constant 3 : index
      %c256 = arith.constant 256 : index
      %30 = vector.load %arg5[%c0_23, %c3, %c256] : memref<1x4x512xf32, #tpu.memory_space<vmem>>, vector<1x1x256xf32>
      %31 = vector.shape_cast %30 : vector<1x1x256xf32> to vector<1x256xf32>
      %32 = arith.addf %29, %31 : vector<1x256xf32>
      %c0_24 = arith.constant 0 : index
      %c7_25 = arith.constant 7 : index
      %c1_26 = arith.constant 1 : index
      %c0_27 = arith.constant 0 : index
      %33 = vector.load %arg6[%c0_24, %c7_25, %c1_26, %c0_27] : memref<1x8x2x256xf32, #tpu.memory_space<vmem>>, vector<1x1x1x256xf32>
      %34 = vector.shape_cast %33 : vector<1x1x1x256xf32> to vector<1x256xf32>
      %35 = vector.shape_cast %32 : vector<1x256xf32> to vector<1x1x1x256xf32>
      tpu.vector_store %arg6[%c0_24, %c7_25, %c1_26, %c0_27], %35 {strides = array<i32>} : memref<1x8x2x256xf32, #tpu.memory_space<vmem>>, vector<1x1x1x256xf32>,
    } else {
    }
    return
  }
  func.func @transform_0(%arg0: i32, %arg1: i32, %arg2: i32) -> (i32, i32, i32) {
    %c0_i32 = arith.constant 0 : i32
    return %arg0, %arg1, %arg2 : i32, i32, i32
  }
  func.func @transform_1(%arg0: i32, %arg1: i32, %arg2: i32) -> (i32, i32) {
    %c0_i32 = arith.constant 0 : i32
    %c0_i32_0 = arith.constant 0 : i32
    %c0_i32_1 = arith.constant 0 : i32
    return %c0_i32, %c0_i32_0 : i32, i32
  }
  func.func @transform_2(%arg0: i32, %arg1: i32, %arg2: i32) -> (i32, i32, i32) {
    %c0_i32 = arith.constant 0 : i32
    %c0_i32_0 = arith.constant 0 : i32
    %c0_i32_1 = arith.constant 0 : i32
    return %arg2, %c0_i32, %c0_i32_0 : i32, i32, i32
  }
  func.func @transform_3(%arg0: i32, %arg1: i32, %arg2: i32) -> (i32, i32, i32, i32) {
    %c0_i32 = arith.constant 0 : i32
    %c0_i32_0 = arith.constant 0 : i32
    return %arg0, %arg1, %c0_i32, %arg2 : i32, i32, i32, i32
  }
}

</mosaic_0001>

<llo_original>
// kernel: tpu_custom_call.1
$region0: #{tpu_custom_call.1}
  #allocation0 [shape = 'u32[]', space=smem, size = 0x4, offset = 0x4, fixed_abs, tag = 'smem constant byte address 0x4 - core index']
  #allocation1 [shape = 'u32[144,128]{1,0:T(1,128)}', space=vmem, size = 0x12000, scoped, tag = 'internal scratch']
  %s0 = inlined_call_operand.hbm [shape: f32[2,16,64], index: 0, kind: input, shape index: {}]
  %s1 = inlined_call_operand.hbm [shape: f32[64,512], index: 1, kind: input, shape index: {}]
  %s2 = inlined_call_operand.hbm [shape: f32[1,4,512], index: 2, kind: input, shape index: {}]
  %s3 = inlined_call_operand.hbm [shape: f32[2,16,2,256], index: 3, kind: output, shape index: {}]
  %s4 = sld [smem:[#allocation0]]
  $region65: #{tpu_custom_call.1} parent=0
    _
  %s6 = ssub.s32 1, %s4
  %s7 = scalar_select 0, %s6, %s4
  $region1: #{tpu_custom_call.1} parent=0
    #allocation2 [shape = 'u8[8192]{0}', space=vmem, size = 0x2000, scoped, tag = 'input window, operand 0']
    #allocation3 [shape = 's32[2]{0}', space=sflag, size = 0x8, scoped, tag = 'scoped memory for tpu_custom_call.1']
    #allocation4 [shape = 's32[2]{0}', space=sflag, size = 0x8, scoped, tag = 'scoped memory for tpu_custom_call.1']
    #allocation5 [shape = 'u8[131072]{0}', space=vmem, size = 0x20000, scoped, tag = 'input window, operand 1, single buffered']
    #allocation6 [shape = 's32[1]{0}', space=sflag, size = 0x4, scoped, tag = 'scoped memory for tpu_custom_call.1']
    #allocation7 [shape = 'u8[8192]{0}', space=vmem, size = 0x2000, scoped, tag = 'input window, operand 2, single buffered']
    #allocation8 [shape = 'u8[32768]{0}', space=vmem, size = 0x8000, scoped, tag = 'output window, operand 0']
    %8 = vsyncpa [#allocation3], 0
    %s9 = scalar_lea.sflag [#allocation3], 1
    %10 = vsyncpa %s9, 0
    %11 = vsyncpa [#allocation6], 0
    %12 = vsyncpa [#allocation4], 0
    %s13 = scalar_lea.sflag [#allocation4], 1
    %14 = vsyncpa %s13, 0
    loop: start=0, step=1, limit=6
    $region2: #{tpu_custom_call.1} parent=1 // loop_pre_header
      _
    $region3: #{tpu_custom_call.1} parent=1 // loop_header
      %s16 = sphi 0, %s20
      %p17 = scmp.ge.s32.totalorder %s16, 6
      %s23 = sphi 0, %s42
      %s24 = sphi 0, %s38
      %s25 = sphi 0, %s34
      %s26 = sphi 0, %s23
      %s27 = sphi 0, %s24
      %s28 = sphi 0, %s25
      %s29 = sphi 0, %s26
      %s30 = sphi 0, %s27
      %s31 = sphi 0, %s28
      %s49 = sphi 0, %s51
      %s52 = sphi 0, %s49
      %s53 = sphi 0, %s52
      %s69 = sphi 0, %s53
      %s73 = sphi 0, %s73
      %s75 = sphi 0, %s73
      %s76 = sphi 0, %s75
      %s90 = sphi 0, %s76
      %s96 = sphi 0, %s98
      %s99 = sphi 0, %s96
      %s100 = sphi 0, %s99
      %s116 = sphi 0, %s100
      %s126 = sphi 0, %s128
      %s129 = sphi 0, %s126
      %s130 = sphi 0, %s129
      %s146 = sphi 0, %s130
    $region4: #{tpu_custom_call.1} parent=1 // loop_header_branch
      %19 = sbr.rel (%p17) target = $region8
    $region5: #{tpu_custom_call.1} parent=1 // loop_body
      %s21 = ssub.s32 %s16, 1
      %s22 = ssub.s32 %s16, 2
      %s32 = sadd.s32 1, %s25
      %p33 = scmp.ge.s32.totalorder %s32, 1
      %s34 = scalar_select %p33, 0, %s32
      %s35 = sadd.s32 1, %s24
      %s36 = scalar_select %p33, %s35, %s24
      %p37 = scmp.ge.s32.totalorder %s36, 2
      %s38 = scalar_select %p37, 0, %s36
      %s39 = sadd.s32 1, %s23
      %s40 = scalar_select %p37, %s39, %s23
      %p41 = scmp.ge.s32.totalorder %s40, 2
      %s42 = scalar_select %p41, 0, %s40
      %s43 = ssub.s32 %s23, %s42
      %s44 = ssub.s32 %s24, %s38
      %s45 = sor.u32 %s43, %s44
      %s46 = ssub.s32 %s25, %s34
      %s47 = sor.u32 %s45, %s46
      %p48 = scmp.eq.s32.totalorder %s47, 0
      %s50 = sadd.s32 %s49, 1
      %s51 = scalar_select %p48, %s49, %s50
      %p54 = pneg %p48
      %p55 = scmp.eq.s32.totalorder %s16, 3
      %p56 = por %p54, %p55
      %p57 = scmp.ne.s32.totalorder %s49, %s52
      %p58 = scmp.eq.s32.totalorder %s16, 0
      %p59 = por %p57, %p58
      %p60 = scmp.ne.s32.totalorder %s49, %s52
      %p61 = scmp.eq.s32.totalorder %s21, 3
      %p62 = por %p60, %p61
      %p63 = scmp.ne.s32.totalorder %s52, %s53
      %p64 = scmp.eq.s32.totalorder %s21, 0
      %p65 = por %p63, %p64
      %p66 = scmp.ne.s32.totalorder %s52, %s53
      %p67 = scmp.eq.s32.totalorder %s22, 3
      %p68 = por %p66, %p67
      %p70 = scmp.ne.s32.totalorder %s53, %s69
      %p71 = scmp.eq.s32.totalorder %s22, 0
      %p72 = por %p70, %p71
      %s74 = sadd.s32 %s73, 1
      %p77 = scmp.eq.s32.totalorder %s16, 3
      %p78 = scmp.ne.s32.totalorder %s73, %s75
      %p79 = scmp.eq.s32.totalorder %s16, 0
      %p80 = por %p78, %p79
      %p81 = scmp.ne.s32.totalorder %s73, %s75
      %p82 = scmp.eq.s32.totalorder %s21, 3
      %p83 = por %p81, %p82
      %p84 = scmp.ne.s32.totalorder %s75, %s76
      %p85 = scmp.eq.s32.totalorder %s21, 0
      %p86 = por %p84, %p85
      %p87 = scmp.ne.s32.totalorder %s75, %s76
      %p88 = scmp.eq.s32.totalorder %s22, 3
      %p89 = por %p87, %p88
      %p91 = scmp.ne.s32.totalorder %s76, %s90
      %p92 = scmp.eq.s32.totalorder %s22, 0
      %p93 = por %p91, %p92
      %s94 = ssub.s32 %s25, %s34
      %p95 = scmp.eq.s32.totalorder %s94, 0
      %s97 = sadd.s32 %s96, 1
      %s98 = scalar_select %p95, %s96, %s97
      %p101 = pneg %p95
      %p102 = scmp.eq.s32.totalorder %s16, 3
      %p103 = por %p101, %p102
      %p104 = scmp.ne.s32.totalorder %s96, %s99
      %p105 = scmp.eq.s32.totalorder %s16, 0
      %p106 = por %p104, %p105
      %p107 = scmp.ne.s32.totalorder %s96, %s99
      %p108 = scmp.eq.s32.totalorder %s21, 3
      %p109 = por %p107, %p108
      %p110 = scmp.ne.s32.totalorder %s99, %s100
      %p111 = scmp.eq.s32.totalorder %s21, 0
      %p112 = por %p110, %p111
      %p113 = scmp.ne.s32.totalorder %s99, %s100
      %p114 = scmp.eq.s32.totalorder %s22, 3
      %p115 = por %p113, %p114
      %p117 = scmp.ne.s32.totalorder %s100, %s116
      %p118 = scmp.eq.s32.totalorder %s22, 0
      %p119 = por %p117, %p118
      %s120 = ssub.s32 %s23, %s42
      %s121 = ssub.s32 %s24, %s38
      %s122 = sor.u32 %s120, %s121
      %s123 = ssub.s32 %s25, %s34
      %s124 = sor.u32 %s122, %s123
      %p125 = scmp.eq.s32.totalorder %s124, 0
      %s127 = sadd.s32 %s126, 1
      %s128 = scalar_select %p125, %s126, %s127
      %p131 = pneg %p125
      %p132 = scmp.eq.s32.totalorder %s16, 3
      %p133 = por %p131, %p132
      %p134 = scmp.ne.s32.totalorder %s126, %s129
      %p135 = scmp.eq.s32.totalorder %s16, 0
      %p136 = por %p134, %p135
      %p137 = scmp.ne.s32.totalorder %s126, %s129
      %p138 = scmp.eq.s32.totalorder %s21, 3
      %p139 = por %p137, %p138
      %p140 = scmp.ne.s32.totalorder %s129, %s130
      %p141 = scmp.eq.s32.totalorder %s21, 0
      %p142 = por %p140, %p141
      %p143 = scmp.ne.s32.totalorder %s129, %s130
      %p144 = scmp.eq.s32.totalorder %s22, 3
      %p145 = por %p143, %p144
      %p147 = scmp.ne.s32.totalorder %s130, %s146
      %p148 = scmp.eq.s32.totalorder %s22, 0
      %p149 = por %p147, %p148
      %p150 = scmp.le.s32.totalorder 1, %s16
      %p151 = scmp.lt.s32.totalorder %s16, 5
      %p152 = pnand %p150, %p151
      %p153 = pneg %p152
      // Predicated region
      $region9: #{tpu_custom_call.1} parent=5 // pred_check
        _
      $region10: #{tpu_custom_call.1} parent=5 // pred_check_branch
        %155 = sbr.rel (%p152) target = $region12
      $region11: #{tpu_custom_call.1} parent=5 // pred_region
        %s156 = ssub.s32 %s16, 1
        // Predicated region
        $region13: #{tpu_custom_call.1} parent=11 // pred_check
          %p157 = pneg %p86
        $region14: #{tpu_custom_call.1} parent=11 // pred_check_branch
          %159 = sbr.rel (%p157) target = $region16
        $region15: #{tpu_custom_call.1} parent=11 // pred_region
          %s161 = ssub.s32 4096, 4096
          %162 = vsyncadd [#allocation6], %s161
          %s163 = sshll.u32 [#allocation5], 4
          %s164 = int_to_ptr.vmem [resolvable:$true] %s163
          %169 = dma.hbm_to_vmem [thread:$0]  %s1, 4096, %s164, [#allocation6], 512, 512, 32
        $region16: #{tpu_custom_call.1} parent=11 // pred_fallthru
          _
        // Predicated region
        $region17: #{tpu_custom_call.1} parent=11 // pred_check
          %p170 = pneg %p112
        $region18: #{tpu_custom_call.1} parent=11 // pred_check_branch
          %172 = sbr.rel (%p170) target = $region20
        $region19: #{tpu_custom_call.1} parent=11 // pred_region
          %s174 = ssub.s32 256, 256
          %175 = vsyncadd [#allocation6], %s174
          %s176 = smul.addr %s28, 4
          %s177 = smul.addr %s176, 64
          %s178 = scalar_lea.hbm %s2, %s177
          %s180 = sshll.u32 [#allocation7], 4
          %s181 = int_to_ptr.vmem [resolvable:$true] %s180
          %183 = dma.hbm_to_vmem [thread:$0]  %s178, 256, %s181, [#allocation6]
        $region20: #{tpu_custom_call.1} parent=11 // pred_fallthru
          _
      $region12: #{tpu_custom_call.1} parent=5 // pred_fallthru
        _
      %p184 = scmp.lt.s32.totalorder %s16, 4
      // Predicated region
      $region21: #{tpu_custom_call.1} parent=5 // pred_check
        %p185 = pneg %p184
      $region22: #{tpu_custom_call.1} parent=5 // pred_check_branch
        %187 = sbr.rel (%p185) target = $region24
      $region23: #{tpu_custom_call.1} parent=5 // pred_region
        // Predicated region
        $region25: #{tpu_custom_call.1} parent=23 // pred_check
          %p188 = pneg %p59
        $region26: #{tpu_custom_call.1} parent=23 // pred_check_branch
          %190 = sbr.rel (%p188) target = $region28
        $region27: #{tpu_custom_call.1} parent=23 // pred_region
          %s191 = sand.u32 %s49, 1
          %s192 = scalar_lea.sflag [#allocation3], %s191
          %s193 = sand.u32 %s49, 1
          %s194 = smul.addr %s193, 8
          %s195 = scalar_lea.vmem [#allocation2], %s194
          %s197 = ssub.s32 128, 128
          %198 = vsyncadd %s192, %s197
          %s199 = sadd.s32 %s25, %s24
          %s200 = smul.addr %s23, 2
          %s201 = sadd.s32 %s199, %s200
          %s202 = smul.addr %s201, 128
          %s203 = scalar_lea.hbm %s0, %s202
          %s205 = sshll.u32 %s195, 4
          %s206 = int_to_ptr.vmem [resolvable:$true] %s205
          %208 = dma.hbm_to_vmem [thread:$0]  %s203, 128, %s206, %s192
        $region28: #{tpu_custom_call.1} parent=23 // pred_fallthru
          _
      $region24: #{tpu_custom_call.1} parent=5 // pred_fallthru
        _
      %p209 = scmp.le.s32.totalorder 1, %s16
      %p210 = scmp.lt.s32.totalorder %s16, 5
      %p211 = pnand %p209, %p210
      %p212 = pneg %p211
      // Predicated region
      $region29: #{tpu_custom_call.1} parent=5 // pred_check
        _
      $region30: #{tpu_custom_call.1} parent=5 // pred_check_branch
        %214 = sbr.rel (%p211) target = $region32
      $region31: #{tpu_custom_call.1} parent=5 // pred_region
        %s215 = ssub.s32 %s16, 1
        %s216 = sand.u32 %s52, 1
        %s217 = scalar_lea.sflag [#allocation3], %s216
        %s218 = sand.u32 %s52, 1
        %s219 = smul.addr %s218, 8
        %s220 = scalar_lea.vmem [#allocation2], %s219
        // Predicated region
        $region33: #{tpu_custom_call.1} parent=31 // pred_check
          %p221 = pneg %p65
        $region34: #{tpu_custom_call.1} parent=31 // pred_check_branch
          %223 = sbr.rel (%p221) target = $region36
        $region35: #{tpu_custom_call.1} parent=31 // pred_region
          %224 = dma.done %s217, 128
        $region36: #{tpu_custom_call.1} parent=31 // pred_fallthru
          _
        // Predicated region
        $region37: #{tpu_custom_call.1} parent=31 // pred_check
          %p225 = pneg %p86
        $region38: #{tpu_custom_call.1} parent=31 // pred_check_branch
          %227 = sbr.rel (%p225) target = $region40
        $region39: #{tpu_custom_call.1} parent=31 // pred_region
          %228 = dma.done [#allocation6], 4096
        $region40: #{tpu_custom_call.1} parent=31 // pred_fallthru
          _
        // Predicated region
        $region41: #{tpu_custom_call.1} parent=31 // pred_check
          %p229 = pneg %p112
        $region42: #{tpu_custom_call.1} parent=31 // pred_check_branch
          %231 = sbr.rel (%p229) target = $region44
        $region43: #{tpu_custom_call.1} parent=31 // pred_region
          %232 = dma.done [#allocation6], 256
        $region44: #{tpu_custom_call.1} parent=31 // pred_fallthru
          _
        %s233 = sand.u32 %s52, 1
        %s234 = scalar_lea.sflag [#allocation3], %s233
        %s235 = sand.u32 %s52, 1
        %s236 = smul.addr %s235, 8
        %s237 = scalar_lea.vmem [#allocation2], %s236
        %p238 = pneg %p65
        %p239 = pneg %p62
        %p240 = pneg %p86
        %p241 = pneg %p83
        %p242 = pneg %p112
        %p243 = pneg %p109
        %p244 = pneg %p142
        %p245 = pneg %p139
        %s246 = sand.u32 %s129, 1
        %s247 = scalar_lea.sflag [#allocation4], %s246
        %s248 = sand.u32 %s129, 1
        %s249 = smul.addr %s248, 32
        %s250 = scalar_lea.vmem [#allocation8], %s249
        %s251 = smul.u32 8, %s27
        %s252 = smul.u32 2, %s28
        %v253 = vld [vmem:[%s220] sm:$0xff]
        %v254 = vld [vmem:[#allocation5] sm:$0xff]
        %v255 = vld [vmem:[#allocation5 + $0x8] sm:$0xff]
        %v256 = vld [vmem:[#allocation5 + $0x10] sm:$0xff]
        %v257 = vld [vmem:[#allocation5 + $0x18] sm:$0xff]
        %v258 = vld [vmem:[#allocation5 + $0x20] sm:$0xff]
        %v259 = vld [vmem:[#allocation5 + $0x28] sm:$0xff]
        %v260 = vld [vmem:[#allocation5 + $0x30] sm:$0xff]
        %v261 = vld [vmem:[#allocation5 + $0x38] sm:$0xff]
        %v262 = vld [vmem:[#allocation5 + $0x40] sm:$0xff]
        %v263 = vld [vmem:[#allocation5 + $0x48] sm:$0xff]
        %v264 = vld [vmem:[#allocation5 + $0x50] sm:$0xff]
        %v265 = vld [vmem:[#allocation5 + $0x58] sm:$0xff]
        %v266 = vld [vmem:[#allocation5 + $0x60] sm:$0xff]
        %v267 = vld [vmem:[#allocation5 + $0x68] sm:$0xff]
        %v268 = vld [vmem:[#allocation5 + $0x70] sm:$0xff]
        %v269 = vld [vmem:[#allocation5 + $0x78] sm:$0xff]
        %v270 = vld [vmem:[#allocation5 + $0x80] sm:$0xff]
        %v271 = vld [vmem:[#allocation5 + $0x88] sm:$0xff]
        %v272 = vld [vmem:[#allocation5 + $0x90] sm:$0xff]
        %v273 = vld [vmem:[#allocation5 + $0x98] sm:$0xff]
        %v274 = vld [vmem:[#allocation5 + $0xa0] sm:$0xff]
        %v275 = vld [vmem:[#allocation5 + $0xa8] sm:$0xff]
        %v276 = vld [vmem:[#allocation5 + $0xb0] sm:$0xff]
        %v277 = vld [vmem:[#allocation5 + $0xb8] sm:$0xff]
        %v278 = vld [vmem:[#allocation5 + $0xc0] sm:$0xff]
        %v279 = vld [vmem:[#allocation5 + $0xc8] sm:$0xff]
        %v280 = vld [vmem:[#allocation5 + $0xd0] sm:$0xff]
        %v281 = vld [vmem:[#allocation5 + $0xd8] sm:$0xff]
        %v282 = vld [vmem:[#allocation5 + $0xe0] sm:$0xff]
        %v283 = vld [vmem:[#allocation5 + $0xe8] sm:$0xff]
        %v284 = vld [vmem:[#allocation5 + $0xf0] sm:$0xff]
        %v285 = vld [vmem:[#allocation5 + $0xf8] sm:$0xff]
        %v286 = vld [vmem:[#allocation7] ss:$4 sm:$0xf]
        %v288 = vlaneseq
        %v289 = vshrl.u32 %v288, 7
        %v290 = vsub.s32 0, %v289
        %v291 = vrot.slane %v286, %v290
        %v292 = vlaneseq
        %v293 = vshrl.u32 %v292, 7
        %v294 = vsub.s32 1, %v293
        %v295 = vrot.slane %v286, %v294
        %v296 = vlaneseq
        %v297 = vshrl.u32 %v296, 7
        %v298 = vsub.s32 2, %v297
        %v299 = vrot.slane %v286, %v298
        %v300 = vlaneseq
        %v301 = vshrl.u32 %v300, 7
        %v302 = vsub.s32 3, %v301
        %v303 = vrot.slane %v286, %v302
        %vm308 = vcmask 523264
        %v310 = vsel %vm308, %v253, 0
        %312 = vmatprep.subr.mxu0 0.0
        %313 = vmatpush1.msra.mxu0 0.0
        %314 = vmatprep.subr.mxu0 0.0
        %315 = vmatpush1.msra.mxu0 0.0
        %316 = vmatprep.subr.mxu0 0.0
        %317 = vmatpush1.msra.mxu0 0.0
        %318 = vmatprep.subr.mxu0 0.0
        %319 = vmatpush1.msra.mxu0 0.0
        %320 = vmatprep.subr.mxu0 0.0
        %321 = vmatpush1.msra.mxu0 0.0
        %322 = vmatprep.subr.mxu0 0.0
        %323 = vmatpush1.msra.mxu0 0.0
        %324 = vmatprep.subr.mxu0 0.0
        %325 = vmatpush1.msra.mxu0 0.0
        %326 = vmatprep.subr.mxu0 0.0
        %327 = vmatpush1.msra.mxu0 0.0
        %328 = vmatprep.subr.mxu0 %v283
        %329 = vmatpush1.msra.mxu0 %v282
        %330 = vmatprep.subr.mxu0 %v279
        %331 = vmatpush1.msra.mxu0 %v278
        %332 = vmatprep.subr.mxu0 %v275
        %333 = vmatpush1.msra.mxu0 %v274
        %334 = vmatprep.subr.mxu0 %v271
        %335 = vmatpush1.msra.mxu0 %v270
        %336 = vmatprep.subr.mxu0 %v267
        %337 = vmatpush1.msra.mxu0 %v266
        %338 = vmatprep.subr.mxu0 %v263
        %339 = vmatpush1.msra.mxu0 %v262
        %340 = vmatprep.subr.mxu0 %v259
        %341 = vmatpush1.msra.mxu0 %v258
        %342 = vmatprep.subr.mxu0 %v255
        %343 = vmatpush1.msra.mxu0 %v254
        %344 = vmatprep.subr.mxu0 0.0
        %345 = vmatpush2.msra.mxu0 0.0
        %346 = vmatprep.subr.mxu0 0.0
        %347 = vmatpush2.msra.mxu0 0.0
        %348 = vmatprep.subr.mxu0 0.0
        %349 = vmatpush2.msra.mxu0 0.0
        %350 = vmatprep.subr.mxu0 0.0
        %351 = vmatpush2.msra.mxu0 0.0
        %352 = vmatprep.subr.mxu0 0.0
        %353 = vmatpush2.msra.mxu0 0.0
        %354 = vmatprep.subr.mxu0 0.0
        %355 = vmatpush2.msra.mxu0 0.0
        %356 = vmatprep.subr.mxu0 0.0
        %357 = vmatpush2.msra.mxu0 0.0
        %358 = vmatprep.subr.mxu0 0.0
        %359 = vmatpush2.msra.mxu0 0.0
        %360 = vmatprep.subr.mxu0 0.0
        %361 = vmatpush2.msra.mxu0 0.0
        %362 = vmatprep.subr.mxu0 0.0
        %363 = vmatpush2.msra.mxu0 0.0
        %364 = vmatprep.subr.mxu0 0.0
        %365 = vmatpush2.msra.mxu0 0.0
        %366 = vmatprep.subr.mxu0 0.0
        %367 = vmatpush2.msra.mxu0 0.0
        %368 = vmatprep.subr.mxu0 0.0
        %369 = vmatpush2.msra.mxu0 0.0
        %370 = vmatprep.subr.mxu0 0.0
        %371 = vmatpush2.msra.mxu0 0.0
        %372 = vmatprep.subr.mxu0 0.0
        %373 = vmatpush2.msra.mxu0 0.0
        %374 = vmatprep.subr.mxu0 0.0
        %375 = vmatpush2.msra.mxu0 0.0
        %376 = vmatprep.mubr.f32.mxu0 0.0
        %377 = vmatmul.mubr.f32.gmra.mxu0 %v310
        %v378 = vpop.f32.mrf.mxu0
        %v379 = vadd.f32 %v291, %v378
        %v380 = vpop.f32.mrf.mxu0
        %v381 = vadd.f32 %v295, %v380
        %382 = vdwg.mxu0
        %383 = vmatprep.subr.mxu0 0.0
        %384 = vmatpush1.msra.mxu0 0.0
        %385 = vmatprep.subr.mxu0 0.0
        %386 = vmatpush1.msra.mxu0 0.0
        %387 = vmatprep.subr.mxu0 0.0
        %388 = vmatpush1.msra.mxu0 0.0
        %389 = vmatprep.subr.mxu0 0.0
        %390 = vmatpush1.msra.mxu0 0.0
        %391 = vmatprep.subr.mxu0 0.0
        %392 = vmatpush1.msra.mxu0 0.0
        %393 = vmatprep.subr.mxu0 0.0
        %394 = vmatpush1.msra.mxu0 0.0
        %395 = vmatprep.subr.mxu0 0.0
        %396 = vmatpush1.msra.mxu0 0.0
        %397 = vmatprep.subr.mxu0 0.0
        %398 = vmatpush1.msra.mxu0 0.0
        %399 = vmatprep.subr.mxu0 %v285
        %400 = vmatpush1.msra.mxu0 %v284
        %401 = vmatprep.subr.mxu0 %v281
        %402 = vmatpush1.msra.mxu0 %v280
        %403 = vmatprep.subr.mxu0 %v277
        %404 = vmatpush1.msra.mxu0 %v276
        %405 = vmatprep.subr.mxu0 %v273
        %406 = vmatpush1.msra.mxu0 %v272
        %407 = vmatprep.subr.mxu0 %v269
        %408 = vmatpush1.msra.mxu0 %v268
        %409 = vmatprep.subr.mxu0 %v265
        %410 = vmatpush1.msra.mxu0 %v264
        %411 = vmatprep.subr.mxu0 %v261
        %412 = vmatpush1.msra.mxu0 %v260
        %413 = vmatprep.subr.mxu0 %v257
        %414 = vmatpush1.msra.mxu0 %v256
        %415 = vmatprep.subr.mxu0 0.0
        %416 = vmatpush2.msra.mxu0 0.0
        %417 = vmatprep.subr.mxu0 0.0
        %418 = vmatpush2.msra.mxu0 0.0
        %419 = vmatprep.subr.mxu0 0.0
        %420 = vmatpush2.msra.mxu0 0.0
        %421 = vmatprep.subr.mxu0 0.0
        %422 = vmatpush2.msra.mxu0 0.0
        %423 = vmatprep.subr.mxu0 0.0
        %424 = vmatpush2.msra.mxu0 0.0
        %425 = vmatprep.subr.mxu0 0.0
        %426 = vmatpush2.msra.mxu0 0.0
        %427 = vmatprep.subr.mxu0 0.0
        %428 = vmatpush2.msra.mxu0 0.0
        %429 = vmatprep.subr.mxu0 0.0
        %430 = vmatpush2.msra.mxu0 0.0
        %431 = vmatprep.subr.mxu0 0.0
        %432 = vmatpush2.msra.mxu0 0.0
        %433 = vmatprep.subr.mxu0 0.0
        %434 = vmatpush2.msra.mxu0 0.0
        %435 = vmatprep.subr.mxu0 0.0
        %436 = vmatpush2.msra.mxu0 0.0
        %437 = vmatprep.subr.mxu0 0.0
        %438 = vmatpush2.msra.mxu0 0.0
        %439 = vmatprep.subr.mxu0 0.0
        %440 = vmatpush2.msra.mxu0 0.0
        %441 = vmatprep.subr.mxu0 0.0
        %442 = vmatpush2.msra.mxu0 0.0
        %443 = vmatprep.subr.mxu0 0.0
        %444 = vmatpush2.msra.mxu0 0.0
        %445 = vmatprep.subr.mxu0 0.0
        %446 = vmatpush2.msra.mxu0 0.0
        %447 = vmatprep.mubr.f32.mxu0 0.0
        %448 = vmatmul.mubr.f32.gmra.mxu0 %v310
        %v449 = vpop.f32.mrf.mxu0
        %v450 = vadd.f32 %v299, %v449
        %v451 = vpop.f32.mrf.mxu0
        %v452 = vadd.f32 %v303, %v451
        %453 = vdwg.mxu0
        %v454 = vmax.f32 %v379, 0.0
        %v455 = vmax.f32 %v381, 0.0
        %v456 = vmax.f32 %v450, 0.0
        %v457 = vmax.f32 %v452, 0.0
        %s458 = scalar_lea.vmem [#allocation7], 1
        %v459 = vld [vmem:[%s458] ss:$4 sm:$0xf]
        %v461 = vlaneseq
        %v462 = vshrl.u32 %v461, 7
        %v463 = vsub.s32 0, %v462
        %v464 = vrot.slane %v459, %v463
        %v465 = vlaneseq
        %v466 = vshrl.u32 %v465, 7
        %v467 = vsub.s32 1, %v466
        %v468 = vrot.slane %v459, %v467
        %v469 = vlaneseq
        %v470 = vshrl.u32 %v469, 7
        %v471 = vsub.s32 2, %v470
        %v472 = vrot.slane %v459, %v471
        %v473 = vlaneseq
        %v474 = vshrl.u32 %v473, 7
        %v475 = vsub.s32 3, %v474
        %v476 = vrot.slane %v459, %v475
        %v481 = vadd.f32 %v454, %v464
        %v482 = vadd.f32 %v455, %v468
        %v483 = vadd.f32 %v456, %v472
        %v484 = vadd.f32 %v457, %v476
        %v487 = vcombine.low %v481, %v482
        %v488 = vcombine.high %v481, %v482
        %v490 = vunpack.c.l.s4 1966171168
        %v491 = vunpack.c.0.s8 %v490
        %v492 = vlaneseq
        %v493 = vshrl.u32 %v492, 7
        %v494 = vsub.s32 %v491, %v493
        %v495 = vrot.slane %v487, %v494
        %v497 = vunpack.c.l.s4 1966171168
        %v498 = vunpack.c.0.s8 %v497
        %v499 = vlaneseq
        %v500 = vshrl.u32 %v499, 7
        %v501 = vsub.s32 %v498, %v500
        %v502 = vrot.slane %v488, %v501
        %v503 = vcombine.high %v495, %v495
        %v504 = vcombine.high %v502, %v502
        %v506 = vunpack.c.l.s4 1966171168
        %v507 = vunpack.c.0.s8 %v506
        %v508 = vlaneseq
        %v509 = vshrl.u32 %v508, 7
        %v510 = vsub.s32 %v507, %v509
        %v511 = vrot.slane %v495, %v510
        %v513 = vunpack.c.l.s4 1966171168
        %v514 = vunpack.c.0.s8 %v513
        %v515 = vlaneseq
        %v516 = vshrl.u32 %v515, 7
        %v517 = vsub.s32 %v514, %v516
        %v518 = vrot.slane %v502, %v517
        %v520 = vunpack.c.l.s4 1966171168
        %v521 = vunpack.c.0.s8 %v520
        %v522 = vlaneseq
        %v523 = vshrl.u32 %v522, 7
        %v524 = vsub.s32 %v521, %v523
        %v525 = vrot.slane %v503, %v524
        %v527 = vunpack.c.l.s4 1966171168
        %v528 = vunpack.c.0.s8 %v527
        %v529 = vlaneseq
        %v530 = vshrl.u32 %v529, 7
        %v531 = vsub.s32 %v528, %v530
        %v532 = vrot.slane %v504, %v531
        %v533 = vcombine.high %v511, %v511
        %v534 = vcombine.high %v518, %v518
        %v535 = vcombine.high %v525, %v525
        %v536 = vcombine.high %v532, %v532
        %v545 = vlaneseq
        %vm546 = vcmp.ge.s32.totalorder %v545, 0
        %vm547 = vcmp.lt.s32.totalorder %v545, 256
        %vm548 = vmand %vm546, %vm547
        %549 = vst.msk [vmem:[%s250] ss:$2 sm:$0x3] %vm548, %v511
        %s550 = scalar_lea.vmem %s250, 4 [#allocation8]
        %551 = vst.msk [vmem:[%s550] ss:$2 sm:$0x3] %vm548, %v525
        %s552 = scalar_lea.vmem %s250, 8 [#allocation8]
        %553 = vst.msk [vmem:[%s552] ss:$2 sm:$0x3] %vm548, %v533
        %s554 = scalar_lea.vmem %s250, 12 [#allocation8]
        %555 = vst.msk [vmem:[%s554] ss:$2 sm:$0x3] %vm548, %v535
        %s556 = scalar_lea.vmem %s250, 16 [#allocation8]
        %557 = vst.msk [vmem:[%s556] ss:$2 sm:$0x3] %vm548, %v518
        %s558 = scalar_lea.vmem %s250, 20 [#allocation8]
        %559 = vst.msk [vmem:[%s558] ss:$2 sm:$0x3] %vm548, %v532
        %s560 = scalar_lea.vmem %s250, 24 [#allocation8]
        %561 = vst.msk [vmem:[%s560] ss:$2 sm:$0x3] %vm548, %v534
        %s562 = scalar_lea.vmem %s250, 28 [#allocation8]
        %563 = vst.msk [vmem:[%s562] ss:$2 sm:$0x3] %vm548, %v536
        %v566 = vcombine.low %v483, %v484
        %v567 = vcombine.high %v483, %v484
        %v569 = vunpack.c.l.s4 1966171168
        %v570 = vunpack.c.0.s8 %v569
        %v571 = vlaneseq
        %v572 = vshrl.u32 %v571, 7
        %v573 = vsub.s32 %v570, %v572
        %v574 = vrot.slane %v566, %v573
        %v576 = vunpack.c.l.s4 1966171168
        %v577 = vunpack.c.0.s8 %v576
        %v578 = vlaneseq
        %v579 = vshrl.u32 %v578, 7
        %v580 = vsub.s32 %v577, %v579
        %v581 = vrot.slane %v567, %v580
        %v582 = vcombine.high %v574, %v574
        %v583 = vcombine.high %v581, %v581
        %v585 = vunpack.c.l.s4 1966171168
        %v586 = vunpack.c.0.s8 %v585
        %v587 = vlaneseq
        %v588 = vshrl.u32 %v587, 7
        %v589 = vsub.s32 %v586, %v588
        %v590 = vrot.slane %v574, %v589
        %v592 = vunpack.c.l.s4 1966171168
        %v593 = vunpack.c.0.s8 %v592
        %v594 = vlaneseq
        %v595 = vshrl.u32 %v594, 7
        %v596 = vsub.s32 %v593, %v595
        %v597 = vrot.slane %v581, %v596
        %v599 = vunpack.c.l.s4 1966171168
        %v600 = vunpack.c.0.s8 %v599
        %v601 = vlaneseq
        %v602 = vshrl.u32 %v601, 7
        %v603 = vsub.s32 %v600, %v602
        %v604 = vrot.slane %v582, %v603
        %v606 = vunpack.c.l.s4 1966171168
        %v607 = vunpack.c.0.s8 %v606
        %v608 = vlaneseq
        %v609 = vshrl.u32 %v608, 7
        %v610 = vsub.s32 %v607, %v609
        %v611 = vrot.slane %v583, %v610
        %v612 = vcombine.high %v590, %v590
        %v613 = vcombine.high %v597, %v597
        %v614 = vcombine.high %v604, %v604
        %v615 = vcombine.high %v611, %v611
        %s624 = scalar_lea.vmem %s250, 1 [#allocation8]
        %625 = vst.msk [vmem:[%s624] ss:$2 sm:$0x3] %vm548, %v590
        %s626 = scalar_lea.vmem %s250, 5 [#allocation8]
        %627 = vst.msk [vmem:[%s626] ss:$2 sm:$0x3] %vm548, %v604
        %s628 = scalar_lea.vmem %s250, 9 [#allocation8]
        %629 = vst.msk [vmem:[%s628] ss:$2 sm:$0x3] %vm548, %v612
        %s630 = scalar_lea.vmem %s250, 13 [#allocation8]
        %631 = vst.msk [vmem:[%s630] ss:$2 sm:$0x3] %vm548, %v614
        %s632 = scalar_lea.vmem %s250, 17 [#allocation8]
        %633 = vst.msk [vmem:[%s632] ss:$2 sm:$0x3] %vm548, %v597
        %s634 = scalar_lea.vmem %s250, 21 [#allocation8]
        %635 = vst.msk [vmem:[%s634] ss:$2 sm:$0x3] %vm548, %v611
        %s636 = scalar_lea.vmem %s250, 25 [#allocation8]
        %637 = vst.msk [vmem:[%s636] ss:$2 sm:$0x3] %vm548, %v613
        %s638 = scalar_lea.vmem %s250, 29 [#allocation8]
        %639 = vst.msk [vmem:[%s638] ss:$2 sm:$0x3] %vm548, %v615
        %p640 = scmp.eq.s32.totalorder %s27, 0
        // Predicated region
        $region45: #{tpu_custom_call.1} parent=31 // pred_check
          %p641 = pneg %p640
        $region46: #{tpu_custom_call.1} parent=31 // pred_check_branch
          %643 = sbr.rel (%p641) target = $region48
        $region47: #{tpu_custom_call.1} parent=31 // pred_region
          %v644 = vld [vmem:[%s250] ss:$2 sm:$0x3]
          %s645 = scalar_lea.vmem [#allocation7], 2
          %v646 = vld [vmem:[%s645] ss:$4 sm:$0x3]
          %v647 = vadd.f32 %v644, %v646
          %648 = vst.msk [vmem:[%s250] ss:$2 sm:$0x3] %vm548, %v647
        $region48: #{tpu_custom_call.1} parent=31 // pred_fallthru
          _
        %p649 = scmp.eq.s32.totalorder %s27, 1
        // Predicated region
        $region49: #{tpu_custom_call.1} parent=31 // pred_check
          %p650 = pneg %p649
        $region50: #{tpu_custom_call.1} parent=31 // pred_check_branch
          %652 = sbr.rel (%p650) target = $region52
        $region51: #{tpu_custom_call.1} parent=31 // pred_region
          %s653 = scalar_lea.vmem %s250, 28 [#allocation8]
          %s654 = scalar_lea.vmem %s653, 1 [#allocation8]
          %v655 = vld [vmem:[%s654] ss:$2 sm:$0x3]
          %s656 = scalar_lea.vmem [#allocation7], 11
          %v657 = vld [vmem:[%s656] ss:$4 sm:$0x3]
          %v658 = vadd.f32 %v655, %v657
          %659 = vst.msk [vmem:[%s654] ss:$2 sm:$0x3] %vm548, %v658
        $region52: #{tpu_custom_call.1} parent=31 // pred_fallthru
          _
        %s660 = sand.u32 %s129, 1
        %s661 = scalar_lea.sflag [#allocation4], %s660
        %s662 = sand.u32 %s129, 1
        %s663 = smul.addr %s662, 32
        %s664 = scalar_lea.vmem [#allocation8], %s663
        // Predicated region
        $region53: #{tpu_custom_call.1} parent=31 // pred_check
          %p665 = pneg %p139
        $region54: #{tpu_custom_call.1} parent=31 // pred_check_branch
          %667 = sbr.rel (%p665) target = $region56
        $region55: #{tpu_custom_call.1} parent=31 // pred_region
          %s668 = smul.u32 8, %s27
          %s669 = smul.u32 2, %s28
          %s671 = ssub.s32 512, 512
          %672 = vsyncadd %s661, %s671
          %s673 = smul.addr %s668, 2
          %s674 = sadd.s32 %s669, %s673
          %s675 = smul.addr %s26, 32
          %s676 = sadd.s32 %s674, %s675
          %s677 = smul.addr %s676, 32
          %s678 = scalar_lea.hbm %s3, %s677
          %s679 = sshll.u32 %s664, 4
          %s680 = int_to_ptr.vmem [resolvable:$true] %s679
          %685 = dma.vmem_to_hbm [thread:$0]  %s680, 512, %s678, %s661, 64, 64, 4
        $region56: #{tpu_custom_call.1} parent=31 // pred_fallthru
          _
      $region32: #{tpu_custom_call.1} parent=5 // pred_fallthru
        _
      %p686 = scmp.le.s32.totalorder 2, %s16
      // Predicated region
      $region57: #{tpu_custom_call.1} parent=5 // pred_check
        %p687 = pneg %p686
      $region58: #{tpu_custom_call.1} parent=5 // pred_check_branch
        %689 = sbr.rel (%p687) target = $region60
      $region59: #{tpu_custom_call.1} parent=5 // pred_region
        %s690 = ssub.s32 %s16, 2
        // Predicated region
        $region61: #{tpu_custom_call.1} parent=59 // pred_check
          %p691 = pneg %p145
        $region62: #{tpu_custom_call.1} parent=59 // pred_check_branch
          %693 = sbr.rel (%p691) target = $region64
        $region63: #{tpu_custom_call.1} parent=59 // pred_region
          %s694 = sand.u32 %s130, 1
          %s695 = scalar_lea.sflag [#allocation4], %s694
          %s696 = sand.u32 %s130, 1
          %s697 = smul.addr %s696, 32
          %s698 = scalar_lea.vmem [#allocation8], %s697
          %699 = dma.done %s695, 512
        $region64: #{tpu_custom_call.1} parent=59 // pred_fallthru
          _
      $region60: #{tpu_custom_call.1} parent=5 // pred_fallthru
        _
    $region6: #{tpu_custom_call.1} parent=1 // loop_footer
      %s20 = sadd.s32 1, %s16
    $region7: #{tpu_custom_call.1} parent=1 // loop_footer_branch
      %15 = sbr.rel target = $region3
    $region8: #{tpu_custom_call.1} parent=1 // loop_exit
      _
    %700 = vsyncpa [#allocation3], 1
    %s701 = scalar_lea.sflag [#allocation3], 1
    %702 = vsyncpa %s701, 1
    %703 = vsyncpa [#allocation6], 1
    %704 = vsyncpa [#allocation4], 1
    %s705 = scalar_lea.sflag [#allocation4], 1
    %706 = vsyncpa %s705, 1

</llo_original>
